<compile_context>
chip_gen: v7x
topology: tpu7x:2x2x1
jax: 0.10.0
libtpu: 0.0.40
codegen_flags: <defaults>
</compile_context>

<pallas_src>
import jax
import jax.numpy as jnp
from jax.experimental import pallas as pl
from jax.experimental.pallas import tpu as pltpu


def _cross_layer_kernel(x0_ref, x1_ref, w_ref, b_ref, o_ref):
    x0 = x0_ref[...].astype(jnp.float32)      # (tb, D)
    x1 = x1_ref[...].astype(jnp.float32)      # (tb, D)
    w = w_ref[...].astype(jnp.float32)        # (1, D)  resident
    b = b_ref[...].astype(jnp.float32)        # (1, D)  resident
    # per-row dot product: matmul(x1.view(-1,1,D), w) -> (tb, 1)
    res = jnp.sum(x1 * w, axis=-1, keepdims=True)
    # cross = x0 * res ; out = cross + b + x1  (b folded into the x1 add)
    o_ref[...] = (x0 * res + (x1 + b)).astype(o_ref.dtype)


def _round_up(x, m):
    return -(-x // m) * m


def _tpu_config():
    """(num_tensorcores_per_chip, tile_budget_bytes, vmem_limit_bytes)."""
    kind = ""
    try:
        kind = jax.devices()[0].device_kind.lower()
    except Exception:
        pass
    if "v7" in kind:
        # v7x: 2 TCs/chip, only 64 MiB VMEM per TC -> smaller budget + headroom.
        return 2, 20 << 20, 44 << 20
    # v5e / v6e (and unknown): single TC, 128 MiB VMEM.
    return 1, 24 << 20, 64 << 20


def _choose_tb(B, D, *, itemsize, granule, num_cores, tile_budget_bytes, tb_cap):
    """Largest granule-multiple batch tile that fits the tile budget.

    Budget covers double-buffered x0, x1 and out tiles:
        6 * tb * D * itemsize  <=  tile_budget_bytes
    On multi-TC chips (v7x) additionally cap so each core gets >= 2 steps
    (restores per-core double-buffering) and prefer an even step count.
    """
    tb = tile_budget_bytes // (6 * D * itemsize)
    tb = max(granule, (tb // granule) * granule)
    tb = min(tb, tb_cap)
    # Never exceed the (granule-rounded) batch: one partial block is enough.
    tb = min(tb, _round_up(B, granule))

    if num_cores > 1:
        min_steps = 2 * num_cores
        if B > min_steps * granule:
            per_step = max(granule, _round_up(-(-B // min_steps), granule))
            tb = min(tb, per_step)
        # Prefer an even number of grid steps so both TCs stay balanced.
        steps = -(-B // tb)
        if steps > 1 and steps % 2 == 1:
            tb_even = max(granule, _round_up(-(-B // (steps + 1)), granule))
            tb = min(tb, tb_even)
    return tb


def cross_layer(x0, x1, w, b, *, tb=None):
    """x0, x1: (B, D) float32/bfloat16; w, b: (D,) float32. Returns (B, D)."""
    B, D = x1.shape
    assert x0.shape == (B, D)

    itemsize = jnp.dtype(x1.dtype).itemsize
    granule = max(8, 32 // max(itemsize, 1))   # 8 for f32, 16 for bf16

    num_cores, tile_budget, vmem_limit = _tpu_config()
    if tb is None:
        tb = _choose_tb(B, D, itemsize=itemsize, granule=granule,
                        num_cores=num_cores, tile_budget_bytes=tile_budget,
                        tb_cap=8192)

    w2 = w.reshape(1, D)
    b2 = b.reshape(1, D)

    out = pl.pallas_call(
        _cross_layer_kernel,
        out_shape=jax.ShapeDtypeStruct((B, D), x1.dtype),
        grid_spec=pltpu.PrefetchScalarGridSpec(
            num_scalar_prefetch=0,
            grid=(pl.cdiv(B, tb),),          # partial last block handled by Pallas
            in_specs=[
                pl.BlockSpec((tb, D), lambda i: (i, 0)),   # x0 tile
                pl.BlockSpec((tb, D), lambda i: (i, 0)),   # x1 tile
                pl.BlockSpec((1, D), lambda i: (0, 0)),    # w (broadcast, resident)
                pl.BlockSpec((1, D), lambda i: (0, 0)),    # b (broadcast, resident)
            ],
            out_specs=pl.BlockSpec((tb, D), lambda i: (i, 0)),
        ),
        compiler_params=pltpu.CompilerParams(
            dimension_semantics=("parallel",),
            vmem_limit_bytes=vmem_limit,
        ),
        cost_estimate=pl.CostEstimate(
            flops=4 * B * D,
            transcendentals=0,
            bytes_accessed=3 * B * D * itemsize + 2 * D * 4,
        ),
    )(x0, x1, w2, b2)
    return out


def cross_layer_ref(x0, x1, w, b):
    # pure-JAX reference mirroring the torch code
    D = x1.shape[-1]
    res = jnp.matmul(x1.reshape(-1, 1, D).astype(jnp.float32),
                     w.astype(jnp.float32))            # (N, 1)
    cross = x0.astype(jnp.float32) * res
    return (cross + b + x1.astype(jnp.float32)).astype(x1.dtype)


if __name__ == "__main__":
    key = jax.random.PRNGKey(0)
    k0, k1, kw = jax.random.split(key, 3)

    B, D = 16, 128
    x0 = jax.random.normal(k0, (B, D), dtype=jnp.float32)
    x1 = jax.random.normal(k1, (B, D), dtype=jnp.float32)
    # In the torch module w is drawn at forward time and b is zeros; here they
    # are deterministic explicit inputs.
    w = jax.random.normal(kw, (D,), dtype=jnp.float32)
    b = jnp.zeros((D,), dtype=jnp.float32)

    out = jax.block_until_ready(cross_layer(x0, x1, w, b))
    ref = cross_layer_ref(x0, x1, w, b)
    assert out.shape == (B, D)
    assert jnp.allclose(out, ref, atol=1e-4, rtol=1e-4)

    # Ragged batch (not a sublane multiple): exercises the masked partial
    # last block (no pad/slice copies anymore).
    B2 = 20
    x0b = jax.random.normal(k0, (B2, D), dtype=jnp.float32)
    x1b = jax.random.normal(k1, (B2, D), dtype=jnp.float32)
    out2 = jax.block_until_ready(cross_layer(x0b, x1b, w, b))
    ref2 = cross_layer_ref(x0b, x1b, w, b)
    assert out2.shape == (B2, D)
    assert jnp.allclose(out2, ref2, atol=1e-4, rtol=1e-4)

    print("KERNEL_OK")
</pallas_src>

<mosaic_0001>
module attributes {stable_mosaic.version = 11 : i64} {
  func.func @_cross_layer_kernel(%arg0: i32, %arg1: memref<16x128xf32, #tpu.memory_space<vmem>>, %arg2: memref<16x128xf32, #tpu.memory_space<vmem>>, %arg3: memref<1x128xf32, #tpu.memory_space<vmem>>, %arg4: memref<1x128xf32, #tpu.memory_space<vmem>>, %arg5: memref<16x128xf32, #tpu.memory_space<vmem>>) attributes {dimension_semantics = [#tpu.dimension_semantics<parallel>], iteration_bounds = array<i64: 1>, scalar_prefetch = 0 : i64, scratch_operands = 0 : i64, tpu.core_type = #tpu.core_type<tc>, window_params = [{transform_indices = @transform_0, window_bounds = array<i64: 16, 128>}, {transform_indices = @transform_1, window_bounds = array<i64: 16, 128>}, {pipeline_mode = #tpu.pipeline_mode<synchronous>, transform_indices = @transform_2, window_bounds = array<i64: 1, 128>}, {pipeline_mode = #tpu.pipeline_mode<synchronous>, transform_indices = @transform_3, window_bounds = array<i64: 1, 128>}, {transform_indices = @transform_4, window_bounds = array<i64: 16, 128>}]} {
    %c0 = arith.constant 0 : index
    %c0_0 = arith.constant 0 : index
    %0 = vector.load %arg1[%c0, %c0_0] : memref<16x128xf32, #tpu.memory_space<vmem>>, vector<16x128xf32>
    %c0_1 = arith.constant 0 : index
    %c0_2 = arith.constant 0 : index
    %1 = vector.load %arg2[%c0_1, %c0_2] : memref<16x128xf32, #tpu.memory_space<vmem>>, vector<16x128xf32>
    %c0_3 = arith.constant 0 : index
    %c0_4 = arith.constant 0 : index
    %2 = vector.load %arg3[%c0_3, %c0_4] : memref<1x128xf32, #tpu.memory_space<vmem>>, vector<1x128xf32>
    %c0_5 = arith.constant 0 : index
    %c0_6 = arith.constant 0 : index
    %3 = vector.load %arg4[%c0_5, %c0_6] : memref<1x128xf32, #tpu.memory_space<vmem>>, vector<1x128xf32>
    %4 = vector.broadcast %2 : vector<1x128xf32> to vector<16x128xf32>
    %5 = arith.mulf %1, %4 : vector<16x128xf32>
    %cst = arith.constant dense<0.000000e+00> : vector<16xf32>
    %6 = vector.multi_reduction <add>, %5, %cst [1] : vector<16x128xf32> to vector<16xf32>
    %7 = vector.shape_cast %6 : vector<16xf32> to vector<16x1xf32>
    %8 = vector.broadcast %7 : vector<16x1xf32> to vector<16x128xf32>
    %9 = arith.mulf %0, %8 : vector<16x128xf32>
    %10 = vector.broadcast %3 : vector<1x128xf32> to vector<16x128xf32>
    %11 = arith.addf %1, %10 : vector<16x128xf32>
    %12 = arith.addf %9, %11 : vector<16x128xf32>
    %c0_7 = arith.constant 0 : index
    %c0_8 = arith.constant 0 : index
    %13 = vector.load %arg5[%c0_7, %c0_8] : memref<16x128xf32, #tpu.memory_space<vmem>>, vector<16x128xf32>
    tpu.vector_store %arg5[%c0_7, %c0_8], %12 {strides = array<i32>} : memref<16x128xf32, #tpu.memory_space<vmem>>, vector<16x128xf32>,
    return
  }
  func.func @transform_0(%arg0: i32) -> (i32, i32) {
    %c0_i32 = arith.constant 0 : i32
    %c0_i32_0 = arith.constant 0 : i32
    return %arg0, %c0_i32 : i32, i32
  }
  func.func @transform_1(%arg0: i32) -> (i32, i32) {
    %c0_i32 = arith.constant 0 : i32
    %c0_i32_0 = arith.constant 0 : i32
    return %arg0, %c0_i32 : i32, i32
  }
  func.func @transform_2(%arg0: i32) -> (i32, i32) {
    %c0_i32 = arith.constant 0 : i32
    %c0_i32_0 = arith.constant 0 : i32
    %c0_i32_1 = arith.constant 0 : i32
    return %c0_i32, %c0_i32_0 : i32, i32
  }
  func.func @transform_3(%arg0: i32) -> (i32, i32) {
    %c0_i32 = arith.constant 0 : i32
    %c0_i32_0 = arith.constant 0 : i32
    %c0_i32_1 = arith.constant 0 : i32
    return %c0_i32, %c0_i32_0 : i32, i32
  }
  func.func @transform_4(%arg0: i32) -> (i32, i32) {
    %c0_i32 = arith.constant 0 : i32
    %c0_i32_0 = arith.constant 0 : i32
    return %arg0, %c0_i32 : i32, i32
  }
}

</mosaic_0001>

<llo_original>
// kernel: tpu_custom_call.1
$region0: #{tpu_custom_call.1}
  #allocation0 [shape = 'u32[]', space=smem, size = 0x4, offset = 0x4, fixed_abs, tag = 'smem constant byte address 0x4 - core index']
  #allocation1 [shape = 'u32[144,128]{1,0:T(1,128)}', space=vmem, size = 0x12000, scoped, tag = 'internal scratch']
  %s0 = inlined_call_operand.hbm [shape: f32[16,128], index: 0, kind: input, shape index: {}]
  %s1 = inlined_call_operand.hbm [shape: f32[16,128], index: 1, kind: input, shape index: {}]
  %s2 = inlined_call_operand.hbm [shape: f32[1,128], index: 2, kind: input, shape index: {}]
  %s3 = inlined_call_operand.hbm [shape: f32[1,128], index: 3, kind: input, shape index: {}]
  %s4 = inlined_call_operand.hbm [shape: f32[16,128], index: 4, kind: output, shape index: {}]
  %s5 = sld [smem:[#allocation0]]
  $region42: #{tpu_custom_call.1} parent=0
    _
  %s7 = ssub.s32 1, %s5
  %s8 = scalar_select 0, %s7, %s5
  $region1: #{tpu_custom_call.1} parent=0
    #allocation2 [shape = 'u8[8192]{0}', space=vmem, size = 0x2000, scoped, tag = 'input window, operand 0, single buffered']
    #allocation3 [shape = 's32[1]{0}', space=sflag, size = 0x4, scoped, tag = 'scoped memory for tpu_custom_call.1']
    #allocation4 [shape = 's32[1]{0}', space=sflag, size = 0x4, scoped, tag = 'scoped memory for tpu_custom_call.1']
    #allocation5 [shape = 'u8[8192]{0}', space=vmem, size = 0x2000, scoped, tag = 'input window, operand 1, single buffered']
    #allocation6 [shape = 's32[1]{0}', space=sflag, size = 0x4, scoped, tag = 'scoped memory for tpu_custom_call.1']
    #allocation7 [shape = 'u8[512]{0}', space=vmem, size = 0x400, scoped, tag = 'input window, operand 2, single buffered']
    #allocation8 [shape = 'u8[512]{0}', space=vmem, size = 0x400, scoped, tag = 'input window, operand 3, single buffered']
    #allocation9 [shape = 's32[1]{0}', space=sflag, size = 0x4, scoped, tag = 'scoped memory for tpu_custom_call.1']
    #allocation10 [shape = 'u8[8192]{0}', space=vmem, size = 0x2000, scoped, tag = 'output window, operand 0, single buffered']
    %9 = vsyncpa [#allocation3], 0
    %10 = vsyncpa [#allocation6], 0
    %11 = vsyncpa [#allocation9], 0
    %12 = vsyncpa [#allocation4], 0
    // Predicated region
    $region2: #{tpu_custom_call.1} parent=1 // pred_check
      _
    $region3: #{tpu_custom_call.1} parent=1 // pred_check_branch
      %14 = sbr.rel (0) target = $region5
    $region4: #{tpu_custom_call.1} parent=1 // pred_region
      %s16 = ssub.s32 256, 256
      %17 = vsyncadd [#allocation3], %s16
      %s18 = sshll.u32 [#allocation2], 4
      %s19 = int_to_ptr.vmem [resolvable:$true] %s18
      %24 = dma.hbm_to_vmem [thread:$0]  %s0, 256, %s19, [#allocation3], 128, 128, 8
    $region5: #{tpu_custom_call.1} parent=1 // pred_fallthru
      _
    // Predicated region
    $region6: #{tpu_custom_call.1} parent=1 // pred_check
      _
    $region7: #{tpu_custom_call.1} parent=1 // pred_check_branch
      %26 = sbr.rel (0) target = $region9
    $region8: #{tpu_custom_call.1} parent=1 // pred_region
      %s28 = ssub.s32 256, 256
      %29 = vsyncadd [#allocation6], %s28
      %s30 = sshll.u32 [#allocation5], 4
      %s31 = int_to_ptr.vmem [resolvable:$true] %s30
      %36 = dma.hbm_to_vmem [thread:$0]  %s1, 256, %s31, [#allocation6], 128, 128, 8
    $region9: #{tpu_custom_call.1} parent=1 // pred_fallthru
      _
    // Predicated region
    $region10: #{tpu_custom_call.1} parent=1 // pred_check
      _
    $region11: #{tpu_custom_call.1} parent=1 // pred_check_branch
      %38 = sbr.rel (0) target = $region13
    $region12: #{tpu_custom_call.1} parent=1 // pred_region
      %s40 = ssub.s32 16, 16
      %41 = vsyncadd [#allocation6], %s40
      %s43 = sshll.u32 [#allocation7], 4
      %s44 = int_to_ptr.vmem [resolvable:$true] %s43
      %46 = dma.hbm_to_vmem [thread:$0]  %s2, 16, %s44, [#allocation6]
    $region13: #{tpu_custom_call.1} parent=1 // pred_fallthru
      _
    // Predicated region
    $region14: #{tpu_custom_call.1} parent=1 // pred_check
      _
    $region15: #{tpu_custom_call.1} parent=1 // pred_check_branch
      %48 = sbr.rel (0) target = $region17
    $region16: #{tpu_custom_call.1} parent=1 // pred_region
      %s50 = ssub.s32 16, 16
      %51 = vsyncadd [#allocation9], %s50
      %s53 = sshll.u32 [#allocation8], 4
      %s54 = int_to_ptr.vmem [resolvable:$true] %s53
      %56 = dma.hbm_to_vmem [thread:$0]  %s3, 16, %s54, [#allocation9]
    $region17: #{tpu_custom_call.1} parent=1 // pred_fallthru
      _
    // Predicated region
    $region18: #{tpu_custom_call.1} parent=1 // pred_check
      _
    $region19: #{tpu_custom_call.1} parent=1 // pred_check_branch
      %58 = sbr.rel (0) target = $region21
    $region20: #{tpu_custom_call.1} parent=1 // pred_region
      %59 = dma.done [#allocation3], 256
    $region21: #{tpu_custom_call.1} parent=1 // pred_fallthru
      _
    // Predicated region
    $region22: #{tpu_custom_call.1} parent=1 // pred_check
      _
    $region23: #{tpu_custom_call.1} parent=1 // pred_check_branch
      %61 = sbr.rel (0) target = $region25
    $region24: #{tpu_custom_call.1} parent=1 // pred_region
      %62 = dma.done [#allocation6], 256
    $region25: #{tpu_custom_call.1} parent=1 // pred_fallthru
      _
    // Predicated region
    $region26: #{tpu_custom_call.1} parent=1 // pred_check
      _
    $region27: #{tpu_custom_call.1} parent=1 // pred_check_branch
      %64 = sbr.rel (0) target = $region29
    $region28: #{tpu_custom_call.1} parent=1 // pred_region
      %65 = dma.done [#allocation6], 16
    $region29: #{tpu_custom_call.1} parent=1 // pred_fallthru
      _
    // Predicated region
    $region30: #{tpu_custom_call.1} parent=1 // pred_check
      _
    $region31: #{tpu_custom_call.1} parent=1 // pred_check_branch
      %67 = sbr.rel (0) target = $region33
    $region32: #{tpu_custom_call.1} parent=1 // pred_region
      %68 = dma.done [#allocation9], 16
    $region33: #{tpu_custom_call.1} parent=1 // pred_fallthru
      _
    %v69 = vld [vmem:[#allocation2] sm:$0xff]
    %v70 = vld [vmem:[#allocation2 + $0x8] sm:$0xff]
    %v71 = vld [vmem:[#allocation5] sm:$0xff]
    %v72 = vld [vmem:[#allocation5 + $0x8] sm:$0xff]
    %v73 = vld [vmem:[#allocation7] sm:$0x1]
    %v74 = vld [vmem:[#allocation8] sm:$0x1]
    %v76 = vlaneseq
    %v77 = vshrl.u32 %v76, 7
    %v78 = vsub.s32 0, %v77
    %v79 = vrot.slane %v73, %v78
    %v81 = vmul.f32 %v71, %v79
    %v82 = vmul.f32 %v72, %v79
    %83 = vadd.xlane.f32.xlu0 %v81
    %v84 = vpop.xlane.xlu0 %83
    %85 = vadd.xlane.f32.xlu0 %v82
    %v86 = vpop.xlane.xlu0 %85
    %v87 = vmul.f32 %v69, %v84
    %v88 = vmul.f32 %v70, %v86
    %v90 = vlaneseq
    %v91 = vshrl.u32 %v90, 7
    %v92 = vsub.s32 0, %v91
    %v93 = vrot.slane %v74, %v92
    %v95 = vadd.f32 %v71, %v93
    %v96 = vadd.f32 %v72, %v93
    %v97 = vadd.f32 %v87, %v95
    %v98 = vadd.f32 %v88, %v96
    %99 = vst [vmem:[#allocation10] sm:$0xff] %v97
    %100 = vst [vmem:[#allocation10 + $0x8] sm:$0xff] %v98
    // Predicated region
    $region34: #{tpu_custom_call.1} parent=1 // pred_check
      _
    $region35: #{tpu_custom_call.1} parent=1 // pred_check_branch
      %102 = sbr.rel (0) target = $region37
    $region36: #{tpu_custom_call.1} parent=1 // pred_region
      %s104 = ssub.s32 256, 256
      %105 = vsyncadd [#allocation4], %s104
      %s106 = sshll.u32 [#allocation10], 4
      %s107 = int_to_ptr.vmem [resolvable:$true] %s106
      %112 = dma.vmem_to_hbm [thread:$0]  %s107, 256, %s4, [#allocation4], 128, 128, 8
    $region37: #{tpu_custom_call.1} parent=1 // pred_fallthru
      _
    // Predicated region
    $region38: #{tpu_custom_call.1} parent=1 // pred_check
      _
    $region39: #{tpu_custom_call.1} parent=1 // pred_check_branch
      %114 = sbr.rel (0) target = $region41
    $region40: #{tpu_custom_call.1} parent=1 // pred_region
      %115 = dma.done [#allocation4], 256
    $region41: #{tpu_custom_call.1} parent=1 // pred_fallthru
      _
    %116 = vsyncpa [#allocation3], 1
    %117 = vsyncpa [#allocation6], 1
    %118 = vsyncpa [#allocation9], 1
    %119 = vsyncpa [#allocation4], 1

</llo_original>
